<compile_context>
chip_gen: v7x
topology: tpu7x:2x2x1
jax: 0.10.0
libtpu: 0.0.40
codegen_flags: <defaults>
</compile_context>

<pallas_src>
import jax
import jax.numpy as jnp
from jax.experimental import pallas as pl
from jax.experimental.pallas import tpu as pltpu


def _round_up(x, m):
    return (x + m - 1) // m * m


def _cdiv(a, b):
    return -(-a // b)


def _time_embedding_kernel(x_ref, dconst_ref, w1_ref, b1_ref, w2_ref, o_ref):
    # x_ref:      (Bt, 1)   f32   timestep tile (advances with the grid)
    # dconst_ref: (3, Dp)   f32   row0 = frequencies (0 in pad lanes)
    #                             row1 = cos-half mask (1.0 where output j is cos)
    #                             row2 = b2 (0 in pad lanes)
    # w1_ref:     (Dp, Hp)  weight dtype (zero-padded)
    # b1_ref:     (1, Hp)   f32
    # w2_ref:     (Hp, Dp)  weight dtype (zero-padded)
    # o_ref:      (Bt, Dp)  f32
    freq = dconst_ref[0:1, :]
    cos_mask = dconst_ref[1:2, :]
    b2 = dconst_ref[2:3, :]

    ang = x_ref[...] * freq                                       # (Bt, Dp), f32
    # Lane-dense [sin | cos] embedding without a concatenate; cos computed directly
    # (not sin(a + pi/2)) for numerical parity at large angles.  Pad lanes: sin(0)=0.
    emb = jnp.where(cos_mask > 0.0, jnp.cos(ang), jnp.sin(ang))

    # MLP on the MXU: f32 accumulation; elementwise (tanh, bias) stays f32.
    h = jnp.dot(emb.astype(w1_ref.dtype), w1_ref[...],
                preferred_element_type=jnp.float32)
    h = jnp.tanh(h + b1_ref[...])
    out = jnp.dot(h.astype(w2_ref.dtype), w2_ref[...],
                  preferred_element_type=jnp.float32)
    o_ref[...] = out + b2


def prepare_time_embedding_params(w1, b1, w2, b2, *, weight_dtype=jnp.bfloat16):
    """One-time parameter prep (pad/cast + constant rows). Reuse across calls.

    w1: (D, 4D), b1: (4D,), w2: (4D, D), b2: (D,) -- weights stored (in, out),
    i.e. transposed relative to nn.Linear's (out, in).
    """
    D, H = int(w1.shape[0]), int(w1.shape[1])
    assert D % 2 == 0, "TimeEmbedding dim must be even (half = dim // 2)"
    assert w2.shape == (H, D) and b1.shape == (H,) and b2.shape == (D,)
    half = D // 2
    f32 = jnp.float32

    Dp = _round_up(D, 128)
    Hp = _round_up(H, 128)

    if (Dp, Hp) == (D, H):
        # Common case (D, 4D multiples of 128): no pad re-materialization, just cast.
        w1p = w1.astype(weight_dtype)
        w2p = w2.astype(weight_dtype)
        b1p = b1.astype(f32).reshape(1, Hp)
        b2_row = b2.astype(f32)
    else:
        w1p = jnp.zeros((Dp, Hp), weight_dtype).at[:D, :H].set(w1.astype(weight_dtype))
        w2p = jnp.zeros((Hp, Dp), weight_dtype).at[:H, :D].set(w2.astype(weight_dtype))
        b1p = jnp.zeros((1, Hp), f32).at[0, :H].set(b1.astype(f32))
        b2_row = jnp.zeros((Dp,), f32).at[:D].set(b2.astype(f32))

    # emb[:, j] = sin(x * f_{j mod half}) for j < half, cos(...) for half <= j < D, 0 for pad.
    j = jnp.arange(Dp)
    base = jnp.exp(-jnp.log(f32(1000.0)) * jnp.mod(j, half).astype(f32) / f32(half))
    freq_row = jnp.where(j < D, base, 0.0).astype(f32)
    cos_mask = jnp.where((j >= half) & (j < D), 1.0, 0.0).astype(f32)
    dconst = jnp.stack([freq_row, cos_mask, jnp.broadcast_to(b2_row, (Dp,))], axis=0)

    return dict(dconst=dconst, w1=w1p, b1=b1p, w2=w2p, dim=D, hidden=H)


def time_embedding(x, params, *, block_b=128):
    """Apply sinusoidal time embedding + 2-layer MLP (Tanh). x: (B,) -> (B, D) f32."""
    D = params["dim"]
    dconst, w1p, b1p, w2p = params["dconst"], params["w1"], params["b1"], params["w2"]
    Dp, Hp = int(w1p.shape[0]), int(w1p.shape[1])
    B = int(x.shape[0])
    f32 = jnp.float32

    # Batch tiling: size tiles from B so padding stays small (B=130 -> Bp=144, not 256);
    # for B >= 16 use at least 2 tiles so v7x's two TensorCores both get work
    # (one extra ~0.35us grid step on 1-TC v5e/v6e: negligible).
    n_tiles = max(_cdiv(max(B, 1), block_b), 2 if B >= 16 else 1)
    Bt = min(_round_up(_cdiv(max(B, 1), n_tiles), 8), _round_up(block_b, 8))
    Bp = Bt * n_tiles

    x2d = jnp.zeros((Bp, 1), f32).at[:B, 0].set(x.astype(f32))

    def run(single_buffer_consts):
        if single_buffer_consts:
            def const_spec(shape):
                # Constant index_map already elides re-DMA; Buffered(1) also drops the
                # second VMEM buffer so resident weight VMEM is counted honestly.
                return pl.BlockSpec(shape, lambda i: (0, 0), pipeline_mode=pl.Buffered(1))
        else:
            def const_spec(shape):
                return pl.BlockSpec(shape, lambda i: (0, 0))

        n_w_bufs = 1 if single_buffer_consts else 2
        w_bytes = jnp.dtype(w1p.dtype).itemsize
        vmem_est = (
            n_w_bufs * (Dp * Hp + Hp * Dp) * w_bytes   # resident weights
            + n_w_bufs * (Hp + 3 * Dp) * 4             # b1 + (freq/mask/b2) rows
            + 2 * (Bt * 1 + Bt * Dp) * 4               # double-buffered x / out tiles
            + 2 * Bt * (Hp + Dp) * 4                   # emb / hidden activations (+margin)
        )
        # 2x safety margin, 8 MiB floor, capped at 48 MiB (stays below v7x's 64 MiB/TC,
        # leaves headroom for Mosaic internal scratch on every generation).
        vmem_limit = int(min(48 << 20, max(2 * vmem_est, 8 << 20)))

        return pl.pallas_call(
            _time_embedding_kernel,
            out_shape=jax.ShapeDtypeStruct((Bp, Dp), f32),
            grid=(n_tiles,),
            in_specs=[
                pl.BlockSpec((Bt, 1), lambda i: (i, 0)),   # x tile advances with the grid
                const_spec((3, Dp)),                       # freq / cos-mask / b2
                const_spec((Dp, Hp)),                      # w1
                const_spec((1, Hp)),                       # b1
                const_spec((Hp, Dp)),                      # w2
            ],
            out_specs=pl.BlockSpec((Bt, Dp), lambda i: (i, 0)),   # lane-dense unmasked vst
            compiler_params=pltpu.CompilerParams(
                dimension_semantics=("parallel",),         # independent batch tiles
                vmem_limit_bytes=vmem_limit,
            ),
        )(x2d, dconst, w1p, b1p, w2p)

    try:
        out_padded = run(single_buffer_consts=True)
    except Exception:
        # pl.Buffered(1) not supported by this jax version -> default double buffering.
        out_padded = run(single_buffer_consts=False)

    return out_padded[:B, :D]


def _reference(x, w1, b1, w2, b2):
    dim = w1.shape[0]
    half = dim // 2
    freqs = jnp.exp(-jnp.log(jnp.float32(1000.0)) * jnp.arange(half, dtype=jnp.float32) / half)
    ang = x.astype(jnp.float32)[:, None] * freqs[None]
    emb = jnp.concatenate([jnp.sin(ang), jnp.cos(ang)], axis=-1)
    h = jnp.tanh(emb @ w1 + b1)
    return h @ w2 + b2


if __name__ == "__main__":
    dim = 32           # embedding dim (half = 16); hidden = 4*dim = 128
    batch = 8

    key = jax.random.PRNGKey(0)
    k_x, k_w1, k_b1, k_w2, k_b2, k_x2 = jax.random.split(key, 6)

    # nn.Linear-style init: U(-1/sqrt(fan_in), 1/sqrt(fan_in)); weights stored (in, out).
    def init_linear(kw, kb, fan_in, fan_out):
        bound = 1.0 / jnp.sqrt(jnp.float32(fan_in))
        w = jax.random.uniform(kw, (fan_in, fan_out), jnp.float32, -bound, bound)
        b = jax.random.uniform(kb, (fan_out,), jnp.float32, -bound, bound)
        return w, b

    w1, b1 = init_linear(k_w1, k_b1, dim, 4 * dim)
    w2, b2 = init_linear(k_w2, k_b2, 4 * dim, dim)

    # Diffusion-style timesteps in [0, 1000).
    x = jax.random.uniform(k_x, (batch,), jnp.float32, 0.0, 1000.0)
    ref = _reference(x, w1, b1, w2, b2)

    # f32-weight path: tight check vs the pure-JAX reference (cos is computed directly).
    params_f32 = prepare_time_embedding_params(w1, b1, w2, b2, weight_dtype=jnp.float32)
    out = jax.block_until_ready(time_embedding(x, params_f32))
    assert out.shape == (batch, dim)
    assert jnp.allclose(out, ref, atol=5e-3, rtol=5e-3), "f32 kernel mismatch vs reference"

    # Default bf16 weights (MXU-native on v5e/v6e/v7x); params prepared ONCE and reused.
    params = prepare_time_embedding_params(w1, b1, w2, b2)          # bf16 default
    x_big = jax.random.uniform(k_x2, (200,), jnp.float32, 0.0, 1000.0)
    out_big = jax.block_until_ready(time_embedding(x_big, params))  # 2 batch tiles
    ref_big = _reference(x_big, w1, b1, w2, b2)
    assert out_big.shape == (200, dim)
    assert jnp.allclose(out_big, ref_big, atol=5e-2, rtol=5e-2), "bf16 kernel mismatch vs reference"

    # Reuse the same prepared params for another call (no per-call weight pad/cast).
    out_small = jax.block_until_ready(time_embedding(x, params))
    assert jnp.allclose(out_small, ref, atol=5e-2, rtol=5e-2), "bf16 small-batch mismatch"

    print("KERNEL_OK")
</pallas_src>

<mosaic_0001>
module attributes {stable_mosaic.version = 11 : i64} {
  func.func @_time_embedding_kernel(%arg0: i32, %arg1: memref<8x1xf32, #tpu.memory_space<vmem>>, %arg2: memref<3x128xf32, #tpu.memory_space<vmem>>, %arg3: memref<128x128xf32, #tpu.memory_space<vmem>>, %arg4: memref<1x128xf32, #tpu.memory_space<vmem>>, %arg5: memref<128x128xf32, #tpu.memory_space<vmem>>, %arg6: memref<8x128xf32, #tpu.memory_space<vmem>>) attributes {dimension_semantics = [#tpu.dimension_semantics<parallel>], iteration_bounds = array<i64: 1>, scalar_prefetch = 0 : i64, scratch_operands = 0 : i64, tpu.core_type = #tpu.core_type<tc>, window_params = [{transform_indices = @transform_0, window_bounds = array<i64: 8, 1>}, {pipeline_mode = #tpu.pipeline_mode<synchronous>, transform_indices = @transform_1, window_bounds = array<i64: 3, 128>}, {pipeline_mode = #tpu.pipeline_mode<synchronous>, transform_indices = @transform_2, window_bounds = array<i64: 128, 128>}, {pipeline_mode = #tpu.pipeline_mode<synchronous>, transform_indices = @transform_3, window_bounds = array<i64: 1, 128>}, {pipeline_mode = #tpu.pipeline_mode<synchronous>, transform_indices = @transform_4, window_bounds = array<i64: 128, 128>}, {transform_indices = @transform_5, window_bounds = array<i64: 8, 128>}]} {
    %c0 = arith.constant 0 : index
    %c0_0 = arith.constant 0 : index
    %0 = vector.load %arg2[%c0, %c0_0] : memref<3x128xf32, #tpu.memory_space<vmem>>, vector<1x128xf32>
    %c1 = arith.constant 1 : index
    %c0_1 = arith.constant 0 : index
    %1 = vector.load %arg2[%c1, %c0_1] : memref<3x128xf32, #tpu.memory_space<vmem>>, vector<1x128xf32>
    %c2 = arith.constant 2 : index
    %c0_2 = arith.constant 0 : index
    %2 = vector.load %arg2[%c2, %c0_2] : memref<3x128xf32, #tpu.memory_space<vmem>>, vector<1x128xf32>
    %c0_3 = arith.constant 0 : index
    %c0_4 = arith.constant 0 : index
    %3 = vector.load %arg1[%c0_3, %c0_4] : memref<8x1xf32, #tpu.memory_space<vmem>>, vector<8x1xf32>
    %4 = vector.broadcast %3 : vector<8x1xf32> to vector<8x128xf32>
    %5 = vector.broadcast %0 : vector<1x128xf32> to vector<8x128xf32>
    %6 = arith.mulf %4, %5 : vector<8x128xf32>
    %cst = arith.constant 0.000000e+00 : f32
    %7 = vector.broadcast %cst : f32 to vector<1x128xf32>
    %8 = arith.cmpf ogt, %1, %7 : vector<1x128xf32>
    %9 = math.cos %6 : vector<8x128xf32>
    %10 = math.sin %6 : vector<8x128xf32>
    %11 = vector.shape_cast %8 : vector<1x128xi1> to vector<1x128xi1>
    %12 = vector.broadcast %11 : vector<1x128xi1> to vector<8x128xi1>
    %13 = arith.select %12, %9, %10 : vector<8x128xi1>, vector<8x128xf32>
    %c0_5 = arith.constant 0 : index
    %c0_6 = arith.constant 0 : index
    %14 = vector.load %arg3[%c0_5, %c0_6] : memref<128x128xf32, #tpu.memory_space<vmem>>, vector<128x128xf32>
    %cst_7 = arith.constant dense<0.000000e+00> : vector<8x128xf32>
    %15 = tpu.matmul %13, %14, %cst_7 {dimension_numbers = #tpu.dot_dimension_numbers<[1], [0], [0], [1], [0, 0, 1, 1], [], []>} : vector<8x128xf32>, vector<128x128xf32>, vector<8x128xf32> -> vector<8x128xf32>
    %c0_8 = arith.constant 0 : index
    %c0_9 = arith.constant 0 : index
    %16 = vector.load %arg4[%c0_8, %c0_9] : memref<1x128xf32, #tpu.memory_space<vmem>>, vector<1x128xf32>
    %17 = vector.broadcast %16 : vector<1x128xf32> to vector<8x128xf32>
    %18 = arith.addf %15, %17 : vector<8x128xf32>
    %19 = math.tanh %18 : vector<8x128xf32>
    %c0_10 = arith.constant 0 : index
    %c0_11 = arith.constant 0 : index
    %20 = vector.load %arg5[%c0_10, %c0_11] : memref<128x128xf32, #tpu.memory_space<vmem>>, vector<128x128xf32>
    %cst_12 = arith.constant dense<0.000000e+00> : vector<8x128xf32>
    %21 = tpu.matmul %19, %20, %cst_12 {dimension_numbers = #tpu.dot_dimension_numbers<[1], [0], [0], [1], [0, 0, 1, 1], [], []>} : vector<8x128xf32>, vector<128x128xf32>, vector<8x128xf32> -> vector<8x128xf32>
    %22 = vector.broadcast %2 : vector<1x128xf32> to vector<8x128xf32>
    %23 = arith.addf %21, %22 : vector<8x128xf32>
    %c0_13 = arith.constant 0 : index
    %c0_14 = arith.constant 0 : index
    %24 = vector.load %arg6[%c0_13, %c0_14] : memref<8x128xf32, #tpu.memory_space<vmem>>, vector<8x128xf32>
    tpu.vector_store %arg6[%c0_13, %c0_14], %23 {strides = array<i32>} : memref<8x128xf32, #tpu.memory_space<vmem>>, vector<8x128xf32>,
    return
  }
  func.func @transform_0(%arg0: i32) -> (i32, i32) {
    %c0_i32 = arith.constant 0 : i32
    %c0_i32_0 = arith.constant 0 : i32
    return %arg0, %c0_i32 : i32, i32
  }
  func.func @transform_1(%arg0: i32) -> (i32, i32) {
    %c0_i32 = arith.constant 0 : i32
    %c0_i32_0 = arith.constant 0 : i32
    %c0_i32_1 = arith.constant 0 : i32
    return %c0_i32, %c0_i32_0 : i32, i32
  }
  func.func @transform_2(%arg0: i32) -> (i32, i32) {
    %c0_i32 = arith.constant 0 : i32
    %c0_i32_0 = arith.constant 0 : i32
    %c0_i32_1 = arith.constant 0 : i32
    return %c0_i32, %c0_i32_0 : i32, i32
  }
  func.func @transform_3(%arg0: i32) -> (i32, i32) {
    %c0_i32 = arith.constant 0 : i32
    %c0_i32_0 = arith.constant 0 : i32
    %c0_i32_1 = arith.constant 0 : i32
    return %c0_i32, %c0_i32_0 : i32, i32
  }
  func.func @transform_4(%arg0: i32) -> (i32, i32) {
    %c0_i32 = arith.constant 0 : i32
    %c0_i32_0 = arith.constant 0 : i32
    %c0_i32_1 = arith.constant 0 : i32
    return %c0_i32, %c0_i32_0 : i32, i32
  }
  func.func @transform_5(%arg0: i32) -> (i32, i32) {
    %c0_i32 = arith.constant 0 : i32
    %c0_i32_0 = arith.constant 0 : i32
    return %arg0, %c0_i32 : i32, i32
  }
}

module attributes {stable_mosaic.version = 11 : i64} {
  func.func @_time_embedding_kernel(%arg0: i32, %arg1: memref<8x1xf32, #tpu.memory_space<vmem>>, %arg2: memref<3x128xf32, #tpu.memory_space<vmem>>, %arg3: memref<128x128xf32, #tpu.memory_space<vmem>>, %arg4: memref<1x128xf32, #tpu.memory_space<vmem>>, %arg5: memref<128x128xf32, #tpu.memory_space<vmem>>, %arg6: memref<8x128xf32, #tpu.memory_space<vmem>>) attributes {dimension_semantics = [#tpu.dimension_semantics<parallel>], iteration_bounds = array<i64: 1>, scalar_prefetch = 0 : i64, scratch_operands = 0 : i64, tpu.core_type = #tpu.core_type<tc>, window_params = [{transform_indices = @transform_0, window_bounds = array<i64: 8, 1>}, {pipeline_mode = #tpu.pipeline_mode<synchronous>, transform_indices = @transform_1, window_bounds = array<i64: 3, 128>}, {pipeline_mode = #tpu.pipeline_mode<synchronous>, transform_indices = @transform_2, window_bounds = array<i64: 128, 128>}, {pipeline_mode = #tpu.pipeline_mode<synchronous>, transform_indices = @transform_3, window_bounds = array<i64: 1, 128>}, {pipeline_mode = #tpu.pipeline_mode<synchronous>, transform_indices = @transform_4, window_bounds = array<i64: 128, 128>}, {transform_indices = @transform_5, window_bounds = array<i64: 8, 128>}]} {
    %c0 = arith.constant 0 : index
    %c0_0 = arith.constant 0 : index
    %0 = vector.load %arg2[%c0, %c0_0] : memref<3x128xf32, #tpu.memory_space<vmem>>, vector<1x128xf32>
    %c1 = arith.constant 1 : index
    %c0_1 = arith.constant 0 : index
    %1 = vector.load %arg2[%c1, %c0_1] : memref<3x128xf32, #tpu.memory_space<vmem>>, vector<1x128xf32>
    %c2 = arith.constant 2 : index
    %c0_2 = arith.constant 0 : index
    %2 = vector.load %arg2[%c2, %c0_2] : memref<3x128xf32, #tpu.memory_space<vmem>>, vector<1x128xf32>
    %c0_3 = arith.constant 0 : index
    %c0_4 = arith.constant 0 : index
    %3 = vector.load %arg1[%c0_3, %c0_4] : memref<8x1xf32, #tpu.memory_space<vmem>>, vector<8x1xf32>
    %4 = vector.broadcast %3 : vector<8x1xf32> to vector<8x128xf32>
    %5 = vector.broadcast %0 : vector<1x128xf32> to vector<8x128xf32>
    %6 = arith.mulf %4, %5 : vector<8x128xf32>
    %cst = arith.constant 0.000000e+00 : f32
    %7 = vector.broadcast %cst : f32 to vector<1x128xf32>
    %8 = arith.cmpf ogt, %1, %7 : vector<1x128xf32>
    %9 = math.cos %6 : vector<8x128xf32>
    %10 = math.sin %6 : vector<8x128xf32>
    %11 = vector.shape_cast %8 : vector<1x128xi1> to vector<1x128xi1>
    %12 = vector.broadcast %11 : vector<1x128xi1> to vector<8x128xi1>
    %13 = arith.select %12, %9, %10 : vector<8x128xi1>, vector<8x128xf32>
    %c0_5 = arith.constant 0 : index
    %c0_6 = arith.constant 0 : index
    %14 = vector.load %arg3[%c0_5, %c0_6] : memref<128x128xf32, #tpu.memory_space<vmem>>, vector<128x128xf32>
    %cst_7 = arith.constant dense<0.000000e+00> : vector<8x128xf32>
    %15 = tpu.matmul %13, %14, %cst_7 {dimension_numbers = #tpu.dot_dimension_numbers<[1], [0], [0], [1], [0, 0, 1, 1], [], []>} : vector<8x128xf32>, vector<128x128xf32>, vector<8x128xf32> -> vector<8x128xf32>
    %c0_8 = arith.constant 0 : index
    %c0_9 = arith.constant 0 : index
    %16 = vector.load %arg4[%c0_8, %c0_9] : memref<1x128xf32, #tpu.memory_space<vmem>>, vector<1x128xf32>
    %17 = vector.broadcast %16 : vector<1x128xf32> to vector<8x128xf32>
    %18 = arith.addf %15, %17 : vector<8x128xf32>
    %19 = math.tanh %18 : vector<8x128xf32>
    %c0_10 = arith.constant 0 : index
    %c0_11 = arith.constant 0 : index
    %20 = vector.load %arg5[%c0_10, %c0_11] : memref<128x128xf32, #tpu.memory_space<vmem>>, vector<128x128xf32>
    %cst_12 = arith.constant dense<0.000000e+00> : vector<8x128xf32>
    %21 = tpu.matmul %19, %20, %cst_12 {dimension_numbers = #tpu.dot_dimension_numbers<[1], [0], [0], [1], [0, 0, 1, 1], [], []>} : vector<8x128xf32>, vector<128x128xf32>, vector<8x128xf32> -> vector<8x128xf32>
    %22 = vector.broadcast %2 : vector<1x128xf32> to vector<8x128xf32>
    %23 = arith.addf %21, %22 : vector<8x128xf32>
    %c0_13 = arith.constant 0 : index
    %c0_14 = arith.constant 0 : index
    %24 = vector.load %arg6[%c0_13, %c0_14] : memref<8x128xf32, #tpu.memory_space<vmem>>, vector<8x128xf32>
    tpu.vector_store %arg6[%c0_13, %c0_14], %23 {strides = array<i32>} : memref<8x128xf32, #tpu.memory_space<vmem>>, vector<8x128xf32>,
    return
  }
  func.func @transform_0(%arg0: i32) -> (i32, i32) {
    %c0_i32 = arith.constant 0 : i32
    %c0_i32_0 = arith.constant 0 : i32
    return %arg0, %c0_i32 : i32, i32
  }
  func.func @transform_1(%arg0: i32) -> (i32, i32) {
    %c0_i32 = arith.constant 0 : i32
    %c0_i32_0 = arith.constant 0 : i32
    %c0_i32_1 = arith.constant 0 : i32
    return %c0_i32, %c0_i32_0 : i32, i32
  }
  func.func @transform_2(%arg0: i32) -> (i32, i32) {
    %c0_i32 = arith.constant 0 : i32
    %c0_i32_0 = arith.constant 0 : i32
    %c0_i32_1 = arith.constant 0 : i32
    return %c0_i32, %c0_i32_0 : i32, i32
  }
  func.func @transform_3(%arg0: i32) -> (i32, i32) {
    %c0_i32 = arith.constant 0 : i32
    %c0_i32_0 = arith.constant 0 : i32
    %c0_i32_1 = arith.constant 0 : i32
    return %c0_i32, %c0_i32_0 : i32, i32
  }
  func.func @transform_4(%arg0: i32) -> (i32, i32) {
    %c0_i32 = arith.constant 0 : i32
    %c0_i32_0 = arith.constant 0 : i32
    %c0_i32_1 = arith.constant 0 : i32
    return %c0_i32, %c0_i32_0 : i32, i32
  }
  func.func @transform_5(%arg0: i32) -> (i32, i32) {
    %c0_i32 = arith.constant 0 : i32
    %c0_i32_0 = arith.constant 0 : i32
    return %arg0, %c0_i32 : i32, i32
  }
}

</mosaic_0001>

<llo_original>
// kernel: tpu_custom_call.1
$region0: #{tpu_custom_call.1}
  #allocation0 [shape = 'u32[]', space=smem, size = 0x4, offset = 0x4, fixed_abs, tag = 'smem constant byte address 0x4 - core index']
  #allocation1 [shape = 'u32[144,128]{1,0:T(1,128)}', space=vmem, size = 0x12000, scoped, tag = 'internal scratch']
  %s0 = inlined_call_operand.vmem [shape: f32[8,1], index: 0, kind: input, shape index: {}]
  %s1 = inlined_call_operand.vmem [shape: f32[3,128], index: 1, kind: input, shape index: {}]
  %s2 = inlined_call_operand.hbm [shape: f32[128,128], index: 2, kind: input, shape index: {}]
  %s3 = inlined_call_operand.vmem [shape: f32[1,128], index: 3, kind: input, shape index: {}]
  %s4 = inlined_call_operand.hbm [shape: f32[128,128], index: 4, kind: input, shape index: {}]
  %s5 = inlined_call_operand.hbm [shape: f32[8,128], index: 5, kind: output, shape index: {}]
  %s6 = sld [smem:[#allocation0]]
  $region38: #{tpu_custom_call.1} parent=0
    _
  %s8 = ssub.s32 1, %s6
  %s9 = scalar_select 0, %s8, %s6
  $region1: #{tpu_custom_call.1} parent=0
    #allocation2 [shape = 'u8[65536]{0}', space=vmem, size = 0x10000, scoped, tag = 'input window, operand 2, single buffered']
    #allocation3 [shape = 's32[1]{0}', space=sflag, size = 0x4, scoped, tag = 'scoped memory for tpu_custom_call.1']
    #allocation4 [shape = 's32[1]{0}', space=sflag, size = 0x4, scoped, tag = 'scoped memory for tpu_custom_call.1']
    #allocation5 [shape = 'u8[65536]{0}', space=vmem, size = 0x10000, scoped, tag = 'input window, operand 4, single buffered']
    #allocation6 [shape = 's32[1]{0}', space=sflag, size = 0x4, scoped, tag = 'scoped memory for tpu_custom_call.1']
    #allocation7 [shape = 'u8[4096]{0}', space=vmem, size = 0x1000, scoped, tag = 'output window, operand 0, single buffered']
    %10 = vsyncpa [#allocation3], 0
    %11 = vsyncpa [#allocation6], 0
    %12 = vsyncpa [#allocation4], 0
    // Predicated region
    $region2: #{tpu_custom_call.1} parent=1 // pred_check
      _
    $region3: #{tpu_custom_call.1} parent=1 // pred_check_branch
      %14 = sbr.rel (0) target = $region5
    $region4: #{tpu_custom_call.1} parent=1 // pred_region
      _
    $region5: #{tpu_custom_call.1} parent=1 // pred_fallthru
      _
    // Predicated region
    $region6: #{tpu_custom_call.1} parent=1 // pred_check
      _
    $region7: #{tpu_custom_call.1} parent=1 // pred_check_branch
      %16 = sbr.rel (0) target = $region9
    $region8: #{tpu_custom_call.1} parent=1 // pred_region
      _
    $region9: #{tpu_custom_call.1} parent=1 // pred_fallthru
      _
    // Predicated region
    $region10: #{tpu_custom_call.1} parent=1 // pred_check
      _
    $region11: #{tpu_custom_call.1} parent=1 // pred_check_branch
      %18 = sbr.rel (0) target = $region13
    $region12: #{tpu_custom_call.1} parent=1 // pred_region
      %s20 = ssub.s32 2048, 2048
      %21 = vsyncadd [#allocation3], %s20
      %s22 = sshll.u32 [#allocation2], 4
      %s23 = int_to_ptr.vmem [resolvable:$true] %s22
      %28 = dma.hbm_to_vmem [thread:$0]  %s2, 2048, %s23, [#allocation3], 128, 128, 8
    $region13: #{tpu_custom_call.1} parent=1 // pred_fallthru
      _
    // Predicated region
    $region14: #{tpu_custom_call.1} parent=1 // pred_check
      _
    $region15: #{tpu_custom_call.1} parent=1 // pred_check_branch
      %30 = sbr.rel (0) target = $region17
    $region16: #{tpu_custom_call.1} parent=1 // pred_region
      _
    $region17: #{tpu_custom_call.1} parent=1 // pred_fallthru
      _
    // Predicated region
    $region18: #{tpu_custom_call.1} parent=1 // pred_check
      _
    $region19: #{tpu_custom_call.1} parent=1 // pred_check_branch
      %32 = sbr.rel (0) target = $region21
    $region20: #{tpu_custom_call.1} parent=1 // pred_region
      %s34 = ssub.s32 2048, 2048
      %35 = vsyncadd [#allocation6], %s34
      %s36 = sshll.u32 [#allocation5], 4
      %s37 = int_to_ptr.vmem [resolvable:$true] %s36
      %42 = dma.hbm_to_vmem [thread:$0]  %s4, 2048, %s37, [#allocation6], 128, 128, 8
    $region21: #{tpu_custom_call.1} parent=1 // pred_fallthru
      _
    // Predicated region
    $region22: #{tpu_custom_call.1} parent=1 // pred_check
      _
    $region23: #{tpu_custom_call.1} parent=1 // pred_check_branch
      %44 = sbr.rel (0) target = $region25
    $region24: #{tpu_custom_call.1} parent=1 // pred_region
      %45 = dma.done [#allocation3], 2048
    $region25: #{tpu_custom_call.1} parent=1 // pred_fallthru
      _
    // Predicated region
    $region26: #{tpu_custom_call.1} parent=1 // pred_check
      _
    $region27: #{tpu_custom_call.1} parent=1 // pred_check_branch
      %47 = sbr.rel (0) target = $region29
    $region28: #{tpu_custom_call.1} parent=1 // pred_region
      %48 = dma.done [#allocation6], 2048
    $region29: #{tpu_custom_call.1} parent=1 // pred_fallthru
      _
    %v49 = vld [vmem:[%s1] sm:$0x1]
    %v50 = vld [vmem:[%s1 + $0x1] sm:$0x1]
    %v51 = vld [vmem:[%s1 + $0x2] sm:$0x1]
    %v52 = vld [vmem:[%s0] sm:$0xff]
    %54 = vset.pattern.permute.xlu0 0
    %55 = vperm.xlu0 %54, %v52
    %v56 = vpop.permute.xlu0 %55
    %v58 = vlaneseq
    %v59 = vshrl.u32 %v58, 7
    %v60 = vsub.s32 0, %v59
    %v61 = vrot.slane %v49, %v60
    %v62 = vmul.f32 %v56, %v61
    %vm63 = vcmp.gt.f32.partialorder %v50, 0.0
    %v64 = vand.u32 2147483647, %v62
    %vm65 = vcmp.le.f32.partialorder %v64, 0.7853982
    %vm66 = vcmp.lt.s32.totalorder %v62, 0
    %v67 = vand.u32 %v62, 2139095040
    %v68 = vshrl.u32 %v67, 23
    %v69 = vsub.s32 %v68, 127
    %v70 = vand.u32 2147483647, %v62
    %v71 = vand.u32 %v70, 8388607
    %v72 = vor.u32 %v71, 8388608
    %v73 = vsub.s32 0, %v72
    %v74 = vadd.s32 %v69, 1
    %vm75 = vcmp.gt.s32.totalorder %v74, 0
    %v76 = vsel %vm75, %v74, 0
    %v77 = vshrl.u32 %v76, 5
    %v78 = vand.u32 %v76, 31
    %v79 = vsub.s32 32, %v78
    %v80 = vshrl.u32 683565275, %v79
    %v81 = vshll.u32 683565275, %v78
    %v82 = vshrl.u32 2475754826, %v79
    %v83 = vor.u32 %v81, %v82
    %v84 = vshll.u32 2475754826, %v78
    %v85 = vshrl.u32 2131351028, %v79
    %v86 = vor.u32 %v84, %v85
    %v87 = vshll.u32 2131351028, %v78
    %v88 = vshrl.u32 2102212464, %v79
    %v89 = vor.u32 %v87, %v88
    %v90 = vshll.u32 2102212464, %v78
    %v91 = vshrl.u32 920167782, %v79
    %v92 = vor.u32 %v90, %v91
    %v93 = vshll.u32 920167782, %v78
    %v94 = vshrl.u32 1326507024, %v79
    %v95 = vor.u32 %v93, %v94
    %vm96 = vcmp.lt.s32.totalorder %v77, 1
    %vm97 = vcmp.lt.s32.totalorder %v77, 2
    %vm98 = vcmp.lt.s32.totalorder %v77, 3
    %vm99 = vcmp.lt.s32.totalorder %v77, 4
    %v100 = vsel %vm96, %v80, %v83
    %v101 = vsel %vm99, %v89, 2102212464
    %v102 = vsel %vm98, %v86, %v101
    %v103 = vsel %vm97, %v100, %v102
    %v104 = vsel %vm96, %v83, %v86
    %v105 = vsel %vm99, %v92, 920167782
    %v106 = vsel %vm98, %v89, %v105
    %v107 = vsel %vm97, %v104, %v106
    %v108 = vsel %vm96, %v86, %v89
    %v109 = vsel %vm99, %v95, 1326507024
    %v110 = vsel %vm98, %v92, %v109
    %v111 = vsel %vm97, %v108, %v110
    %v112 = vshll.u32 %v72, 8
    %v113 = vmul.u32.u64.compose %v112, %v111
    %v114 = vextract.low.u32 %v113
    %v115 = vextract.high.u32 %v113
    %v116 = vmul.u32.u64.compose %v112, %v107
    %v117 = vextract.low.u32 %v116
    %v118 = vextract.high.u32 %v116
    %v119 = vmul.u32 %v112, %v103
    %v120 = vadd.s32 %v115, %v117
    %vm121 = vc.u32 %v115, %v117
    %v122 = vadd.s32 %v118, 1
    %v123 = vsel %vm121, %v122, %v118
    %v124 = vadd.s32 %v119, %v123
    %v125 = vadd.s32 %v124, 536870912
    %v126 = vshrl.u32 %v125, 30
    %v127 = vshll.u32 %v126, 30
    %v128 = vsub.s32 %v124, %v127
    %vm129 = vcmp.lt.s32.totalorder %v128, 0
    %v130 = vsub.s32 0, %v128
    %v131 = vsel %vm129, %v130, %v128
    %v132 = vclz %v131
    %v133 = vsub.s32 %v132, 2
    %vm134 = vcmp.gt.s32.totalorder 0, %v133
    %v135 = vsel %vm134, 0, %v133
    %v136 = vsub.s32 32, %v135
    %v137 = vshll.u32 %v128, %v135
    %v138 = vshrl.u32 %v120, %v136
    %v139 = vor.u32 %v137, %v138
    %v140 = vsub.s32 4294967266, %v135
    %v141 = vadd.s32 %v140, 127
    %v142 = vshll.u32 %v141, 23
    %v143 = vor.u32 4788187, %v142
    %v144 = vand.u32 2147483647, %v143
    %v146 = vcvt.s32.f32 %v139
    %v147 = vmul.f32 %v146, %v144
    %v148 = vxor.u32 %v147, 2147483648
    %v149 = vsel %vm66, %v148, %v147
    %v150 = vsub.s32 4, %v126
    %v151 = vsel %vm66, %v150, %v126
    %v152 = vsel %vm65, %v62, %v149
    %v153 = vsel %vm65, 0, %v151
    %v154 = vcosq.f32.pop %v152
    %v155 = vsinq.f32.pop %v152
    %vm156 = vweird.f32 %v62
    %v157 = vand.u32 %v153, 3
    %vm158 = vcmp.lt.s32.totalorder %v157, 2
    %vm159 = vcmp.eq.s32.totalorder %v157, 0
    %v160 = vxor.u32 %v155, 2147483648
    %v161 = vsel %vm159, %v154, %v160
    %vm162 = vcmp.eq.s32.totalorder %v157, 2
    %v163 = vxor.u32 %v154, 2147483648
    %v164 = vsel %vm162, %v163, %v155
    %v165 = vsel %vm158, %v161, %v164
    %v166 = vsel %vm156, nan, %v165
    %v167 = vand.u32 2147483647, %v62
    %vm168 = vcmp.le.f32.partialorder %v167, 0.7853982
    %vm169 = vcmp.lt.s32.totalorder %v62, 0
    %v170 = vand.u32 %v62, 2139095040
    %v171 = vshrl.u32 %v170, 23
    %v172 = vsub.s32 %v171, 127
    %v173 = vand.u32 2147483647, %v62
    %v174 = vand.u32 %v173, 8388607
    %v175 = vor.u32 %v174, 8388608
    %v176 = vsub.s32 0, %v175
    %v177 = vadd.s32 %v172, 1
    %vm178 = vcmp.gt.s32.totalorder %v177, 0
    %v179 = vsel %vm178, %v177, 0
    %v180 = vshrl.u32 %v179, 5
    %v181 = vand.u32 %v179, 31
    %v182 = vsub.s32 32, %v181
    %v183 = vshrl.u32 683565275, %v182
    %v184 = vshll.u32 683565275, %v181
    %v185 = vshrl.u32 2475754826, %v182
    %v186 = vor.u32 %v184, %v185
    %v187 = vshll.u32 2475754826, %v181
    %v188 = vshrl.u32 2131351028, %v182
    %v189 = vor.u32 %v187, %v188
    %v190 = vshll.u32 2131351028, %v181
    %v191 = vshrl.u32 2102212464, %v182
    %v192 = vor.u32 %v190, %v191
    %v193 = vshll.u32 2102212464, %v181
    %v194 = vshrl.u32 920167782, %v182
    %v195 = vor.u32 %v193, %v194
    %v196 = vshll.u32 920167782, %v181
    %v197 = vshrl.u32 1326507024, %v182
    %v198 = vor.u32 %v196, %v197
    %vm199 = vcmp.lt.s32.totalorder %v180, 1
    %vm200 = vcmp.lt.s32.totalorder %v180, 2
    %vm201 = vcmp.lt.s32.totalorder %v180, 3
    %vm202 = vcmp.lt.s32.totalorder %v180, 4
    %v203 = vsel %vm199, %v183, %v186
    %v204 = vsel %vm202, %v192, 2102212464
    %v205 = vsel %vm201, %v189, %v204
    %v206 = vsel %vm200, %v203, %v205
    %v207 = vsel %vm199, %v186, %v189
    %v208 = vsel %vm202, %v195, 920167782
    %v209 = vsel %vm201, %v192, %v208
    %v210 = vsel %vm200, %v207, %v209
    %v211 = vsel %vm199, %v189, %v192
    %v212 = vsel %vm202, %v198, 1326507024
    %v213 = vsel %vm201, %v195, %v212
    %v214 = vsel %vm200, %v211, %v213
    %v215 = vshll.u32 %v175, 8
    %v216 = vmul.u32.u64.compose %v215, %v214
    %v217 = vextract.low.u32 %v216
    %v218 = vextract.high.u32 %v216
    %v219 = vmul.u32.u64.compose %v215, %v210
    %v220 = vextract.low.u32 %v219
    %v221 = vextract.high.u32 %v219
    %v222 = vmul.u32 %v215, %v206
    %v223 = vadd.s32 %v218, %v220
    %vm224 = vc.u32 %v218, %v220
    %v225 = vadd.s32 %v221, 1
    %v226 = vsel %vm224, %v225, %v221
    %v227 = vadd.s32 %v222, %v226
    %v228 = vadd.s32 %v227, 536870912
    %v229 = vshrl.u32 %v228, 30
    %v230 = vshll.u32 %v229, 30
    %v231 = vsub.s32 %v227, %v230
    %vm232 = vcmp.lt.s32.totalorder %v231, 0
    %v233 = vsub.s32 0, %v231
    %v234 = vsel %vm232, %v233, %v231
    %v235 = vclz %v234
    %v236 = vsub.s32 %v235, 2
    %vm237 = vcmp.gt.s32.totalorder 0, %v236
    %v238 = vsel %vm237, 0, %v236
    %v239 = vsub.s32 32, %v238
    %v240 = vshll.u32 %v231, %v238
    %v241 = vshrl.u32 %v223, %v239
    %v242 = vor.u32 %v240, %v241
    %v243 = vsub.s32 4294967266, %v238
    %v244 = vadd.s32 %v243, 127
    %v245 = vshll.u32 %v244, 23
    %v246 = vor.u32 4788187, %v245
    %v247 = vand.u32 2147483647, %v246
    %v249 = vcvt.s32.f32 %v242
    %v250 = vmul.f32 %v249, %v247
    %v251 = vxor.u32 %v250, 2147483648
    %v252 = vsel %vm169, %v251, %v250
    %v253 = vsub.s32 4, %v229
    %v254 = vsel %vm169, %v253, %v229
    %v255 = vsel %vm168, %v62, %v252
    %v256 = vsel %vm168, 0, %v254
    %v257 = vcosq.f32.pop %v255
    %v258 = vsinq.f32.pop %v255
    %vm259 = vweird.f32 %v62
    %v260 = vadd.s32 %v256, 3
    %v261 = vand.u32 %v260, 3
    %vm262 = vcmp.lt.s32.totalorder %v261, 2
    %vm263 = vcmp.eq.s32.totalorder %v261, 0
    %v264 = vxor.u32 %v258, 2147483648
    %v265 = vsel %vm263, %v257, %v264
    %vm266 = vcmp.eq.s32.totalorder %v261, 2
    %v267 = vxor.u32 %v257, 2147483648
    %v268 = vsel %vm266, %v267, %v258
    %v269 = vsel %vm262, %v265, %v268
    %v270 = vsel %vm259, nan, %v269
    %v271 = vsel %vm63, 1, 0
    %v272 = vlaneseq
    %v273 = vshrl.u32 %v272, 7
    %v274 = vsub.s32 0, %v273
    %v275 = vrot.slane %v271, %v274
    %vm276 = vcmp.eq.s32.totalorder %v275, 1
    %v277 = vsel %vm276, %v166, %v270
    %v278 = vld [vmem:[#allocation2] sm:$0xff]
    %v279 = vld [vmem:[#allocation2 + $0x8] sm:$0xff]
    %v280 = vld [vmem:[#allocation2 + $0x10] sm:$0xff]
    %v281 = vld [vmem:[#allocation2 + $0x18] sm:$0xff]
    %v282 = vld [vmem:[#allocation2 + $0x20] sm:$0xff]
    %v283 = vld [vmem:[#allocation2 + $0x28] sm:$0xff]
    %v284 = vld [vmem:[#allocation2 + $0x30] sm:$0xff]
    %v285 = vld [vmem:[#allocation2 + $0x38] sm:$0xff]
    %v286 = vld [vmem:[#allocation2 + $0x40] sm:$0xff]
    %v287 = vld [vmem:[#allocation2 + $0x48] sm:$0xff]
    %v288 = vld [vmem:[#allocation2 + $0x50] sm:$0xff]
    %v289 = vld [vmem:[#allocation2 + $0x58] sm:$0xff]
    %v290 = vld [vmem:[#allocation2 + $0x60] sm:$0xff]
    %v291 = vld [vmem:[#allocation2 + $0x68] sm:$0xff]
    %v292 = vld [vmem:[#allocation2 + $0x70] sm:$0xff]
    %v293 = vld [vmem:[#allocation2 + $0x78] sm:$0xff]
    %v294 = vld [vmem:[%s3] sm:$0x1]
    %v296 = vlaneseq
    %v297 = vshrl.u32 %v296, 7
    %v298 = vsub.s32 0, %v297
    %v299 = vrot.slane %v294, %v298
    %301 = vmatprep.subr.mxu0 0.0
    %302 = vmatpush1.msra.mxu0 %v278
    %303 = vmatprep.subr.mxu0 0.0
    %304 = vmatpush1.msra.mxu0 %v279
    %305 = vmatprep.subr.mxu0 0.0
    %306 = vmatpush1.msra.mxu0 %v280
    %307 = vmatprep.subr.mxu0 0.0
    %308 = vmatpush1.msra.mxu0 %v281
    %309 = vmatprep.subr.mxu0 0.0
    %310 = vmatpush1.msra.mxu0 %v282
    %311 = vmatprep.subr.mxu0 0.0
    %312 = vmatpush1.msra.mxu0 %v283
    %313 = vmatprep.subr.mxu0 0.0
    %314 = vmatpush1.msra.mxu0 %v284
    %315 = vmatprep.subr.mxu0 0.0
    %316 = vmatpush1.msra.mxu0 %v285
    %317 = vmatprep.subr.mxu0 0.0
    %318 = vmatpush1.msra.mxu0 %v286
    %319 = vmatprep.subr.mxu0 0.0
    %320 = vmatpush1.msra.mxu0 %v287
    %321 = vmatprep.subr.mxu0 0.0
    %322 = vmatpush1.msra.mxu0 %v288
    %323 = vmatprep.subr.mxu0 0.0
    %324 = vmatpush1.msra.mxu0 %v289
    %325 = vmatprep.subr.mxu0 0.0
    %326 = vmatpush1.msra.mxu0 %v290
    %327 = vmatprep.subr.mxu0 0.0
    %328 = vmatpush1.msra.mxu0 %v291
    %329 = vmatprep.subr.mxu0 0.0
    %330 = vmatpush1.msra.mxu0 %v292
    %331 = vmatprep.subr.mxu0 0.0
    %332 = vmatpush1.msra.mxu0 %v293
    %333 = vmatprep.subr.mxu0 0.0
    %334 = vmatpush1.msra.mxu0 0.0
    %335 = vmatprep.subr.mxu0 0.0
    %336 = vmatpush1.msra.mxu0 0.0
    %337 = vmatprep.subr.mxu0 0.0
    %338 = vmatpush1.msra.mxu0 0.0
    %339 = vmatprep.subr.mxu0 0.0
    %340 = vmatpush1.msra.mxu0 0.0
    %341 = vmatprep.subr.mxu0 0.0
    %342 = vmatpush1.msra.mxu0 0.0
    %343 = vmatprep.subr.mxu0 0.0
    %344 = vmatpush1.msra.mxu0 0.0
    %345 = vmatprep.subr.mxu0 0.0
    %346 = vmatpush1.msra.mxu0 0.0
    %347 = vmatprep.subr.mxu0 0.0
    %348 = vmatpush1.msra.mxu0 0.0
    %349 = vmatprep.subr.mxu0 0.0
    %350 = vmatpush1.msra.mxu0 0.0
    %351 = vmatprep.subr.mxu0 0.0
    %352 = vmatpush1.msra.mxu0 0.0
    %353 = vmatprep.subr.mxu0 0.0
    %354 = vmatpush1.msra.mxu0 0.0
    %355 = vmatprep.subr.mxu0 0.0
    %356 = vmatpush1.msra.mxu0 0.0
    %357 = vmatprep.subr.mxu0 0.0
    %358 = vmatpush1.msra.mxu0 0.0
    %359 = vmatprep.subr.mxu0 0.0
    %360 = vmatpush1.msra.mxu0 0.0
    %361 = vmatprep.subr.mxu0 0.0
    %362 = vmatpush1.msra.mxu0 0.0
    %363 = vmatprep.subr.mxu0 0.0
    %364 = vmatpush1.msra.mxu0 0.0
    %365 = vmatprep.mubr.f32.mxu0 0.0
    %366 = vmatmul.mubr.f32.gmra.mrb[0].mxu0 %v277
    %v367 = vpop.f32.mrb[0].mxu0
    %v368 = vadd.f32 %v299, %v367
    %v369 = vpop.f32.mrb[0].mxu0
    %370 = vdwg.mxu0
    %v371 = vtanh.pop %v368
    %v372 = vld [vmem:[#allocation5] sm:$0xff]
    %v373 = vld [vmem:[#allocation5 + $0x8] sm:$0xff]
    %v374 = vld [vmem:[#allocation5 + $0x10] sm:$0xff]
    %v375 = vld [vmem:[#allocation5 + $0x18] sm:$0xff]
    %v376 = vld [vmem:[#allocation5 + $0x20] sm:$0xff]
    %v377 = vld [vmem:[#allocation5 + $0x28] sm:$0xff]
    %v378 = vld [vmem:[#allocation5 + $0x30] sm:$0xff]
    %v379 = vld [vmem:[#allocation5 + $0x38] sm:$0xff]
    %v380 = vld [vmem:[#allocation5 + $0x40] sm:$0xff]
    %v381 = vld [vmem:[#allocation5 + $0x48] sm:$0xff]
    %v382 = vld [vmem:[#allocation5 + $0x50] sm:$0xff]
    %v383 = vld [vmem:[#allocation5 + $0x58] sm:$0xff]
    %v384 = vld [vmem:[#allocation5 + $0x60] sm:$0xff]
    %v385 = vld [vmem:[#allocation5 + $0x68] sm:$0xff]
    %v386 = vld [vmem:[#allocation5 + $0x70] sm:$0xff]
    %v387 = vld [vmem:[#allocation5 + $0x78] sm:$0xff]
    %v388 = vlaneseq
    %v389 = vshrl.u32 %v388, 7
    %v390 = vsub.s32 0, %v389
    %v391 = vrot.slane %v51, %v390
    %392 = vmatprep.subr.mxu0 0.0
    %393 = vmatpush1.msra.mxu0 %v372
    %394 = vmatprep.subr.mxu0 0.0
    %395 = vmatpush1.msra.mxu0 %v373
    %396 = vmatprep.subr.mxu0 0.0
    %397 = vmatpush1.msra.mxu0 %v374
    %398 = vmatprep.subr.mxu0 0.0
    %399 = vmatpush1.msra.mxu0 %v375
    %400 = vmatprep.subr.mxu0 0.0
    %401 = vmatpush1.msra.mxu0 %v376
    %402 = vmatprep.subr.mxu0 0.0
    %403 = vmatpush1.msra.mxu0 %v377
    %404 = vmatprep.subr.mxu0 0.0
    %405 = vmatpush1.msra.mxu0 %v378
    %406 = vmatprep.subr.mxu0 0.0
    %407 = vmatpush1.msra.mxu0 %v379
    %408 = vmatprep.subr.mxu0 0.0
    %409 = vmatpush1.msra.mxu0 %v380
    %410 = vmatprep.subr.mxu0 0.0
    %411 = vmatpush1.msra.mxu0 %v381
    %412 = vmatprep.subr.mxu0 0.0
    %413 = vmatpush1.msra.mxu0 %v382
    %414 = vmatprep.subr.mxu0 0.0
    %415 = vmatpush1.msra.mxu0 %v383
    %416 = vmatprep.subr.mxu0 0.0
    %417 = vmatpush1.msra.mxu0 %v384
    %418 = vmatprep.subr.mxu0 0.0
    %419 = vmatpush1.msra.mxu0 %v385
    %420 = vmatprep.subr.mxu0 0.0
    %421 = vmatpush1.msra.mxu0 %v386
    %422 = vmatprep.subr.mxu0 0.0
    %423 = vmatpush1.msra.mxu0 %v387
    %424 = vmatprep.subr.mxu0 0.0
    %425 = vmatpush1.msra.mxu0 0.0
    %426 = vmatprep.subr.mxu0 0.0
    %427 = vmatpush1.msra.mxu0 0.0
    %428 = vmatprep.subr.mxu0 0.0
    %429 = vmatpush1.msra.mxu0 0.0
    %430 = vmatprep.subr.mxu0 0.0
    %431 = vmatpush1.msra.mxu0 0.0
    %432 = vmatprep.subr.mxu0 0.0
    %433 = vmatpush1.msra.mxu0 0.0
    %434 = vmatprep.subr.mxu0 0.0
    %435 = vmatpush1.msra.mxu0 0.0
    %436 = vmatprep.subr.mxu0 0.0
    %437 = vmatpush1.msra.mxu0 0.0
    %438 = vmatprep.subr.mxu0 0.0
    %439 = vmatpush1.msra.mxu0 0.0
    %440 = vmatprep.subr.mxu0 0.0
    %441 = vmatpush1.msra.mxu0 0.0
    %442 = vmatprep.subr.mxu0 0.0
    %443 = vmatpush1.msra.mxu0 0.0
    %444 = vmatprep.subr.mxu0 0.0
    %445 = vmatpush1.msra.mxu0 0.0
    %446 = vmatprep.subr.mxu0 0.0
    %447 = vmatpush1.msra.mxu0 0.0
    %448 = vmatprep.subr.mxu0 0.0
    %449 = vmatpush1.msra.mxu0 0.0
    %450 = vmatprep.subr.mxu0 0.0
    %451 = vmatpush1.msra.mxu0 0.0
    %452 = vmatprep.subr.mxu0 0.0
    %453 = vmatpush1.msra.mxu0 0.0
    %454 = vmatprep.subr.mxu0 0.0
    %455 = vmatpush1.msra.mxu0 0.0
    %456 = vmatprep.mubr.f32.mxu0 0.0
    %457 = vmatmul.mubr.f32.gmra.mrb[0].mxu0 %v371
    %v458 = vpop.f32.mrb[0].mxu0
    %v459 = vadd.f32 %v391, %v458
    %v460 = vpop.f32.mrb[0].mxu0
    %461 = vdwg.mxu0
    %462 = vst [vmem:[#allocation7] sm:$0xff] %v459
    // Predicated region
    $region30: #{tpu_custom_call.1} parent=1 // pred_check
      _
    $region31: #{tpu_custom_call.1} parent=1 // pred_check_branch
      %464 = sbr.rel (0) target = $region33
    $region32: #{tpu_custom_call.1} parent=1 // pred_region
      %s466 = ssub.s32 128, 128
      %467 = vsyncadd [#allocation4], %s466
      %s469 = sshll.u32 [#allocation7], 4
      %s470 = int_to_ptr.vmem [resolvable:$true] %s469
      %472 = dma.vmem_to_hbm [thread:$0]  %s470, 128, %s5, [#allocation4]
    $region33: #{tpu_custom_call.1} parent=1 // pred_fallthru
      _
    // Predicated region
    $region34: #{tpu_custom_call.1} parent=1 // pred_check
      _
    $region35: #{tpu_custom_call.1} parent=1 // pred_check_branch
      %474 = sbr.rel (0) target = $region37
    $region36: #{tpu_custom_call.1} parent=1 // pred_region
      %475 = dma.done [#allocation4], 128
    $region37: #{tpu_custom_call.1} parent=1 // pred_fallthru
      _
    %476 = vsyncpa [#allocation3], 1
    %477 = vsyncpa [#allocation6], 1
    %478 = vsyncpa [#allocation4], 1

// kernel: tpu_custom_call.1
$region0: #{tpu_custom_call.1}
  #allocation0 [shape = 'u32[]', space=smem, size = 0x4, offset = 0x4, fixed_abs, tag = 'smem constant byte address 0x4 - core index']
  #allocation1 [shape = 'u32[144,128]{1,0:T(1,128)}', space=vmem, size = 0x12000, scoped, tag = 'internal scratch']
  %s0 = inlined_call_operand.vmem [shape: f32[8,1], index: 0, kind: input, shape index: {}]
  %s1 = inlined_call_operand.vmem [shape: f32[3,128], index: 1, kind: input, shape index: {}]
  %s2 = inlined_call_operand.hbm [shape: f32[128,128], index: 2, kind: input, shape index: {}]
  %s3 = inlined_call_operand.vmem [shape: f32[1,128], index: 3, kind: input, shape index: {}]
  %s4 = inlined_call_operand.hbm [shape: f32[128,128], index: 4, kind: input, shape index: {}]
  %s5 = inlined_call_operand.hbm [shape: f32[8,128], index: 5, kind: output, shape index: {}]
  %s6 = sld [smem:[#allocation0]]
  $region38: #{tpu_custom_call.1} parent=0
    _
  %s8 = ssub.s32 1, %s6
  %s9 = scalar_select 0, %s8, %s6
  $region1: #{tpu_custom_call.1} parent=0
    #allocation2 [shape = 'u8[65536]{0}', space=vmem, size = 0x10000, scoped, tag = 'input window, operand 2, single buffered']
    #allocation3 [shape = 's32[1]{0}', space=sflag, size = 0x4, scoped, tag = 'scoped memory for tpu_custom_call.1']
    #allocation4 [shape = 's32[1]{0}', space=sflag, size = 0x4, scoped, tag = 'scoped memory for tpu_custom_call.1']
    #allocation5 [shape = 'u8[65536]{0}', space=vmem, size = 0x10000, scoped, tag = 'input window, operand 4, single buffered']
    #allocation6 [shape = 's32[1]{0}', space=sflag, size = 0x4, scoped, tag = 'scoped memory for tpu_custom_call.1']
    #allocation7 [shape = 'u8[4096]{0}', space=vmem, size = 0x1000, scoped, tag = 'output window, operand 0, single buffered']
    %10 = vsyncpa [#allocation3], 0
    %11 = vsyncpa [#allocation6], 0
    %12 = vsyncpa [#allocation4], 0
    // Predicated region
    $region2: #{tpu_custom_call.1} parent=1 // pred_check
      _
    $region3: #{tpu_custom_call.1} parent=1 // pred_check_branch
      %14 = sbr.rel (0) target = $region5
    $region4: #{tpu_custom_call.1} parent=1 // pred_region
      _
    $region5: #{tpu_custom_call.1} parent=1 // pred_fallthru
      _
    // Predicated region
    $region6: #{tpu_custom_call.1} parent=1 // pred_check
      _
    $region7: #{tpu_custom_call.1} parent=1 // pred_check_branch
      %16 = sbr.rel (0) target = $region9
    $region8: #{tpu_custom_call.1} parent=1 // pred_region
      _
    $region9: #{tpu_custom_call.1} parent=1 // pred_fallthru
      _
    // Predicated region
    $region10: #{tpu_custom_call.1} parent=1 // pred_check
      _
    $region11: #{tpu_custom_call.1} parent=1 // pred_check_branch
      %18 = sbr.rel (0) target = $region13
    $region12: #{tpu_custom_call.1} parent=1 // pred_region
      %s20 = ssub.s32 2048, 2048
      %21 = vsyncadd [#allocation3], %s20
      %s22 = sshll.u32 [#allocation2], 4
      %s23 = int_to_ptr.vmem [resolvable:$true] %s22
      %28 = dma.hbm_to_vmem [thread:$0]  %s2, 2048, %s23, [#allocation3], 128, 128, 8
    $region13: #{tpu_custom_call.1} parent=1 // pred_fallthru
      _
    // Predicated region
    $region14: #{tpu_custom_call.1} parent=1 // pred_check
      _
    $region15: #{tpu_custom_call.1} parent=1 // pred_check_branch
      %30 = sbr.rel (0) target = $region17
    $region16: #{tpu_custom_call.1} parent=1 // pred_region
      _
    $region17: #{tpu_custom_call.1} parent=1 // pred_fallthru
      _
    // Predicated region
    $region18: #{tpu_custom_call.1} parent=1 // pred_check
      _
    $region19: #{tpu_custom_call.1} parent=1 // pred_check_branch
      %32 = sbr.rel (0) target = $region21
    $region20: #{tpu_custom_call.1} parent=1 // pred_region
      %s34 = ssub.s32 2048, 2048
      %35 = vsyncadd [#allocation6], %s34
      %s36 = sshll.u32 [#allocation5], 4
      %s37 = int_to_ptr.vmem [resolvable:$true] %s36
      %42 = dma.hbm_to_vmem [thread:$0]  %s4, 2048, %s37, [#allocation6], 128, 128, 8
    $region21: #{tpu_custom_call.1} parent=1 // pred_fallthru
      _
    // Predicated region
    $region22: #{tpu_custom_call.1} parent=1 // pred_check
      _
    $region23: #{tpu_custom_call.1} parent=1 // pred_check_branch
      %44 = sbr.rel (0) target = $region25
    $region24: #{tpu_custom_call.1} parent=1 // pred_region
      %45 = dma.done [#allocation3], 2048
    $region25: #{tpu_custom_call.1} parent=1 // pred_fallthru
      _
    // Predicated region
    $region26: #{tpu_custom_call.1} parent=1 // pred_check
      _
    $region27: #{tpu_custom_call.1} parent=1 // pred_check_branch
      %47 = sbr.rel (0) target = $region29
    $region28: #{tpu_custom_call.1} parent=1 // pred_region
      %48 = dma.done [#allocation6], 2048
    $region29: #{tpu_custom_call.1} parent=1 // pred_fallthru
      _
    %v49 = vld [vmem:[%s1] sm:$0x1]
    %v50 = vld [vmem:[%s1 + $0x1] sm:$0x1]
    %v51 = vld [vmem:[%s1 + $0x2] sm:$0x1]
    %v52 = vld [vmem:[%s0] sm:$0xff]
    %54 = vset.pattern.permute.xlu0 0
    %55 = vperm.xlu0 %54, %v52
    %v56 = vpop.permute.xlu0 %55
    %v58 = vlaneseq
    %v59 = vshrl.u32 %v58, 7
    %v60 = vsub.s32 0, %v59
    %v61 = vrot.slane %v49, %v60
    %v62 = vmul.f32 %v56, %v61
    %vm63 = vcmp.gt.f32.partialorder %v50, 0.0
    %v64 = vand.u32 2147483647, %v62
    %vm65 = vcmp.le.f32.partialorder %v64, 0.7853982
    %vm66 = vcmp.lt.s32.totalorder %v62, 0
    %v67 = vand.u32 %v62, 2139095040
    %v68 = vshrl.u32 %v67, 23
    %v69 = vsub.s32 %v68, 127
    %v70 = vand.u32 2147483647, %v62
    %v71 = vand.u32 %v70, 8388607
    %v72 = vor.u32 %v71, 8388608
    %v73 = vsub.s32 0, %v72
    %v74 = vadd.s32 %v69, 1
    %vm75 = vcmp.gt.s32.totalorder %v74, 0
    %v76 = vsel %vm75, %v74, 0
    %v77 = vshrl.u32 %v76, 5
    %v78 = vand.u32 %v76, 31
    %v79 = vsub.s32 32, %v78
    %v80 = vshrl.u32 683565275, %v79
    %v81 = vshll.u32 683565275, %v78
    %v82 = vshrl.u32 2475754826, %v79
    %v83 = vor.u32 %v81, %v82
    %v84 = vshll.u32 2475754826, %v78
    %v85 = vshrl.u32 2131351028, %v79
    %v86 = vor.u32 %v84, %v85
    %v87 = vshll.u32 2131351028, %v78
    %v88 = vshrl.u32 2102212464, %v79
    %v89 = vor.u32 %v87, %v88
    %v90 = vshll.u32 2102212464, %v78
    %v91 = vshrl.u32 920167782, %v79
    %v92 = vor.u32 %v90, %v91
    %v93 = vshll.u32 920167782, %v78
    %v94 = vshrl.u32 1326507024, %v79
    %v95 = vor.u32 %v93, %v94
    %vm96 = vcmp.lt.s32.totalorder %v77, 1
    %vm97 = vcmp.lt.s32.totalorder %v77, 2
    %vm98 = vcmp.lt.s32.totalorder %v77, 3
    %vm99 = vcmp.lt.s32.totalorder %v77, 4
    %v100 = vsel %vm96, %v80, %v83
    %v101 = vsel %vm99, %v89, 2102212464
    %v102 = vsel %vm98, %v86, %v101
    %v103 = vsel %vm97, %v100, %v102
    %v104 = vsel %vm96, %v83, %v86
    %v105 = vsel %vm99, %v92, 920167782
    %v106 = vsel %vm98, %v89, %v105
    %v107 = vsel %vm97, %v104, %v106
    %v108 = vsel %vm96, %v86, %v89
    %v109 = vsel %vm99, %v95, 1326507024
    %v110 = vsel %vm98, %v92, %v109
    %v111 = vsel %vm97, %v108, %v110
    %v112 = vshll.u32 %v72, 8
    %v113 = vmul.u32.u64.compose %v112, %v111
    %v114 = vextract.low.u32 %v113
    %v115 = vextract.high.u32 %v113
    %v116 = vmul.u32.u64.compose %v112, %v107
    %v117 = vextract.low.u32 %v116
    %v118 = vextract.high.u32 %v116
    %v119 = vmul.u32 %v112, %v103
    %v120 = vadd.s32 %v115, %v117
    %vm121 = vc.u32 %v115, %v117
    %v122 = vadd.s32 %v118, 1
    %v123 = vsel %vm121, %v122, %v118
    %v124 = vadd.s32 %v119, %v123
    %v125 = vadd.s32 %v124, 536870912
    %v126 = vshrl.u32 %v125, 30
    %v127 = vshll.u32 %v126, 30
    %v128 = vsub.s32 %v124, %v127
    %vm129 = vcmp.lt.s32.totalorder %v128, 0
    %v130 = vsub.s32 0, %v128
    %v131 = vsel %vm129, %v130, %v128
    %v132 = vclz %v131
    %v133 = vsub.s32 %v132, 2
    %vm134 = vcmp.gt.s32.totalorder 0, %v133
    %v135 = vsel %vm134, 0, %v133
    %v136 = vsub.s32 32, %v135
    %v137 = vshll.u32 %v128, %v135
    %v138 = vshrl.u32 %v120, %v136
    %v139 = vor.u32 %v137, %v138
    %v140 = vsub.s32 4294967266, %v135
    %v141 = vadd.s32 %v140, 127
    %v142 = vshll.u32 %v141, 23
    %v143 = vor.u32 4788187, %v142
    %v144 = vand.u32 2147483647, %v143
    %v146 = vcvt.s32.f32 %v139
    %v147 = vmul.f32 %v146, %v144
    %v148 = vxor.u32 %v147, 2147483648
    %v149 = vsel %vm66, %v148, %v147
    %v150 = vsub.s32 4, %v126
    %v151 = vsel %vm66, %v150, %v126
    %v152 = vsel %vm65, %v62, %v149
    %v153 = vsel %vm65, 0, %v151
    %v154 = vcosq.f32.pop %v152
    %v155 = vsinq.f32.pop %v152
    %vm156 = vweird.f32 %v62
    %v157 = vand.u32 %v153, 3
    %vm158 = vcmp.lt.s32.totalorder %v157, 2
    %vm159 = vcmp.eq.s32.totalorder %v157, 0
    %v160 = vxor.u32 %v155, 2147483648
    %v161 = vsel %vm159, %v154, %v160
    %vm162 = vcmp.eq.s32.totalorder %v157, 2
    %v163 = vxor.u32 %v154, 2147483648
    %v164 = vsel %vm162, %v163, %v155
    %v165 = vsel %vm158, %v161, %v164
    %v166 = vsel %vm156, nan, %v165
    %v167 = vand.u32 2147483647, %v62
    %vm168 = vcmp.le.f32.partialorder %v167, 0.7853982
    %vm169 = vcmp.lt.s32.totalorder %v62, 0
    %v170 = vand.u32 %v62, 2139095040
    %v171 = vshrl.u32 %v170, 23
    %v172 = vsub.s32 %v171, 127
    %v173 = vand.u32 2147483647, %v62
    %v174 = vand.u32 %v173, 8388607
    %v175 = vor.u32 %v174, 8388608
    %v176 = vsub.s32 0, %v175
    %v177 = vadd.s32 %v172, 1
    %vm178 = vcmp.gt.s32.totalorder %v177, 0
    %v179 = vsel %vm178, %v177, 0
    %v180 = vshrl.u32 %v179, 5
    %v181 = vand.u32 %v179, 31
    %v182 = vsub.s32 32, %v181
    %v183 = vshrl.u32 683565275, %v182
    %v184 = vshll.u32 683565275, %v181
    %v185 = vshrl.u32 2475754826, %v182
    %v186 = vor.u32 %v184, %v185
    %v187 = vshll.u32 2475754826, %v181
    %v188 = vshrl.u32 2131351028, %v182
    %v189 = vor.u32 %v187, %v188
    %v190 = vshll.u32 2131351028, %v181
    %v191 = vshrl.u32 2102212464, %v182
    %v192 = vor.u32 %v190, %v191
    %v193 = vshll.u32 2102212464, %v181
    %v194 = vshrl.u32 920167782, %v182
    %v195 = vor.u32 %v193, %v194
    %v196 = vshll.u32 920167782, %v181
    %v197 = vshrl.u32 1326507024, %v182
    %v198 = vor.u32 %v196, %v197
    %vm199 = vcmp.lt.s32.totalorder %v180, 1
    %vm200 = vcmp.lt.s32.totalorder %v180, 2
    %vm201 = vcmp.lt.s32.totalorder %v180, 3
    %vm202 = vcmp.lt.s32.totalorder %v180, 4
    %v203 = vsel %vm199, %v183, %v186
    %v204 = vsel %vm202, %v192, 2102212464
    %v205 = vsel %vm201, %v189, %v204
    %v206 = vsel %vm200, %v203, %v205
    %v207 = vsel %vm199, %v186, %v189
    %v208 = vsel %vm202, %v195, 920167782
    %v209 = vsel %vm201, %v192, %v208
    %v210 = vsel %vm200, %v207, %v209
    %v211 = vsel %vm199, %v189, %v192
    %v212 = vsel %vm202, %v198, 1326507024
    %v213 = vsel %vm201, %v195, %v212
    %v214 = vsel %vm200, %v211, %v213
    %v215 = vshll.u32 %v175, 8
    %v216 = vmul.u32.u64.compose %v215, %v214
    %v217 = vextract.low.u32 %v216
    %v218 = vextract.high.u32 %v216
    %v219 = vmul.u32.u64.compose %v215, %v210
    %v220 = vextract.low.u32 %v219
    %v221 = vextract.high.u32 %v219
    %v222 = vmul.u32 %v215, %v206
    %v223 = vadd.s32 %v218, %v220
    %vm224 = vc.u32 %v218, %v220
    %v225 = vadd.s32 %v221, 1
    %v226 = vsel %vm224, %v225, %v221
    %v227 = vadd.s32 %v222, %v226
    %v228 = vadd.s32 %v227, 536870912
    %v229 = vshrl.u32 %v228, 30
    %v230 = vshll.u32 %v229, 30
    %v231 = vsub.s32 %v227, %v230
    %vm232 = vcmp.lt.s32.totalorder %v231, 0
    %v233 = vsub.s32 0, %v231
    %v234 = vsel %vm232, %v233, %v231
    %v235 = vclz %v234
    %v236 = vsub.s32 %v235, 2
    %vm237 = vcmp.gt.s32.totalorder 0, %v236
    %v238 = vsel %vm237, 0, %v236
    %v239 = vsub.s32 32, %v238
    %v240 = vshll.u32 %v231, %v238
    %v241 = vshrl.u32 %v223, %v239
    %v242 = vor.u32 %v240, %v241
    %v243 = vsub.s32 4294967266, %v238
    %v244 = vadd.s32 %v243, 127
    %v245 = vshll.u32 %v244, 23
    %v246 = vor.u32 4788187, %v245
    %v247 = vand.u32 2147483647, %v246
    %v249 = vcvt.s32.f32 %v242
    %v250 = vmul.f32 %v249, %v247
    %v251 = vxor.u32 %v250, 2147483648
    %v252 = vsel %vm169, %v251, %v250
    %v253 = vsub.s32 4, %v229
    %v254 = vsel %vm169, %v253, %v229
    %v255 = vsel %vm168, %v62, %v252
    %v256 = vsel %vm168, 0, %v254
    %v257 = vcosq.f32.pop %v255
    %v258 = vsinq.f32.pop %v255
    %vm259 = vweird.f32 %v62
    %v260 = vadd.s32 %v256, 3
    %v261 = vand.u32 %v260, 3
    %vm262 = vcmp.lt.s32.totalorder %v261, 2
    %vm263 = vcmp.eq.s32.totalorder %v261, 0
    %v264 = vxor.u32 %v258, 2147483648
    %v265 = vsel %vm263, %v257, %v264
    %vm266 = vcmp.eq.s32.totalorder %v261, 2
    %v267 = vxor.u32 %v257, 2147483648
    %v268 = vsel %vm266, %v267, %v258
    %v269 = vsel %vm262, %v265, %v268
    %v270 = vsel %vm259, nan, %v269
    %v271 = vsel %vm63, 1, 0
    %v272 = vlaneseq
    %v273 = vshrl.u32 %v272, 7
    %v274 = vsub.s32 0, %v273
    %v275 = vrot.slane %v271, %v274
    %vm276 = vcmp.eq.s32.totalorder %v275, 1
    %v277 = vsel %vm276, %v166, %v270
    %v278 = vld [vmem:[#allocation2] sm:$0xff]
    %v279 = vld [vmem:[#allocation2 + $0x8] sm:$0xff]
    %v280 = vld [vmem:[#allocation2 + $0x10] sm:$0xff]
    %v281 = vld [vmem:[#allocation2 + $0x18] sm:$0xff]
    %v282 = vld [vmem:[#allocation2 + $0x20] sm:$0xff]
    %v283 = vld [vmem:[#allocation2 + $0x28] sm:$0xff]
    %v284 = vld [vmem:[#allocation2 + $0x30] sm:$0xff]
    %v285 = vld [vmem:[#allocation2 + $0x38] sm:$0xff]
    %v286 = vld [vmem:[#allocation2 + $0x40] sm:$0xff]
    %v287 = vld [vmem:[#allocation2 + $0x48] sm:$0xff]
    %v288 = vld [vmem:[#allocation2 + $0x50] sm:$0xff]
    %v289 = vld [vmem:[#allocation2 + $0x58] sm:$0xff]
    %v290 = vld [vmem:[#allocation2 + $0x60] sm:$0xff]
    %v291 = vld [vmem:[#allocation2 + $0x68] sm:$0xff]
    %v292 = vld [vmem:[#allocation2 + $0x70] sm:$0xff]
    %v293 = vld [vmem:[#allocation2 + $0x78] sm:$0xff]
    %v294 = vld [vmem:[%s3] sm:$0x1]
    %v296 = vlaneseq
    %v297 = vshrl.u32 %v296, 7
    %v298 = vsub.s32 0, %v297
    %v299 = vrot.slane %v294, %v298
    %301 = vmatprep.subr.mxu0 0.0
    %302 = vmatpush1.msra.mxu0 %v278
    %303 = vmatprep.subr.mxu0 0.0
    %304 = vmatpush1.msra.mxu0 %v279
    %305 = vmatprep.subr.mxu0 0.0
    %306 = vmatpush1.msra.mxu0 %v280
    %307 = vmatprep.subr.mxu0 0.0
    %308 = vmatpush1.msra.mxu0 %v281
    %309 = vmatprep.subr.mxu0 0.0
    %310 = vmatpush1.msra.mxu0 %v282
    %311 = vmatprep.subr.mxu0 0.0
    %312 = vmatpush1.msra.mxu0 %v283
    %313 = vmatprep.subr.mxu0 0.0
    %314 = vmatpush1.msra.mxu0 %v284
    %315 = vmatprep.subr.mxu0 0.0
    %316 = vmatpush1.msra.mxu0 %v285
    %317 = vmatprep.subr.mxu0 0.0
    %318 = vmatpush1.msra.mxu0 %v286
    %319 = vmatprep.subr.mxu0 0.0
    %320 = vmatpush1.msra.mxu0 %v287
    %321 = vmatprep.subr.mxu0 0.0
    %322 = vmatpush1.msra.mxu0 %v288
    %323 = vmatprep.subr.mxu0 0.0
    %324 = vmatpush1.msra.mxu0 %v289
    %325 = vmatprep.subr.mxu0 0.0
    %326 = vmatpush1.msra.mxu0 %v290
    %327 = vmatprep.subr.mxu0 0.0
    %328 = vmatpush1.msra.mxu0 %v291
    %329 = vmatprep.subr.mxu0 0.0
    %330 = vmatpush1.msra.mxu0 %v292
    %331 = vmatprep.subr.mxu0 0.0
    %332 = vmatpush1.msra.mxu0 %v293
    %333 = vmatprep.subr.mxu0 0.0
    %334 = vmatpush1.msra.mxu0 0.0
    %335 = vmatprep.subr.mxu0 0.0
    %336 = vmatpush1.msra.mxu0 0.0
    %337 = vmatprep.subr.mxu0 0.0
    %338 = vmatpush1.msra.mxu0 0.0
    %339 = vmatprep.subr.mxu0 0.0
    %340 = vmatpush1.msra.mxu0 0.0
    %341 = vmatprep.subr.mxu0 0.0
    %342 = vmatpush1.msra.mxu0 0.0
    %343 = vmatprep.subr.mxu0 0.0
    %344 = vmatpush1.msra.mxu0 0.0
    %345 = vmatprep.subr.mxu0 0.0
    %346 = vmatpush1.msra.mxu0 0.0
    %347 = vmatprep.subr.mxu0 0.0
    %348 = vmatpush1.msra.mxu0 0.0
    %349 = vmatprep.subr.mxu0 0.0
    %350 = vmatpush1.msra.mxu0 0.0
    %351 = vmatprep.subr.mxu0 0.0
    %352 = vmatpush1.msra.mxu0 0.0
    %353 = vmatprep.subr.mxu0 0.0
    %354 = vmatpush1.msra.mxu0 0.0
    %355 = vmatprep.subr.mxu0 0.0
    %356 = vmatpush1.msra.mxu0 0.0
    %357 = vmatprep.subr.mxu0 0.0
    %358 = vmatpush1.msra.mxu0 0.0
    %359 = vmatprep.subr.mxu0 0.0
    %360 = vmatpush1.msra.mxu0 0.0
    %361 = vmatprep.subr.mxu0 0.0
    %362 = vmatpush1.msra.mxu0 0.0
    %363 = vmatprep.subr.mxu0 0.0
    %364 = vmatpush1.msra.mxu0 0.0
    %365 = vmatprep.mubr.f32.mxu0 0.0
    %366 = vmatmul.mubr.f32.gmra.mrb[0].mxu0 %v277
    %v367 = vpop.f32.mrb[0].mxu0
    %v368 = vadd.f32 %v299, %v367
    %v369 = vpop.f32.mrb[0].mxu0
    %370 = vdwg.mxu0
    %v371 = vtanh.pop %v368
    %v372 = vld [vmem:[#allocation5] sm:$0xff]
    %v373 = vld [vmem:[#allocation5 + $0x8] sm:$0xff]
    %v374 = vld [vmem:[#allocation5 + $0x10] sm:$0xff]
    %v375 = vld [vmem:[#allocation5 + $0x18] sm:$0xff]
    %v376 = vld [vmem:[#allocation5 + $0x20] sm:$0xff]
    %v377 = vld [vmem:[#allocation5 + $0x28] sm:$0xff]
    %v378 = vld [vmem:[#allocation5 + $0x30] sm:$0xff]
    %v379 = vld [vmem:[#allocation5 + $0x38] sm:$0xff]
    %v380 = vld [vmem:[#allocation5 + $0x40] sm:$0xff]
    %v381 = vld [vmem:[#allocation5 + $0x48] sm:$0xff]
    %v382 = vld [vmem:[#allocation5 + $0x50] sm:$0xff]
    %v383 = vld [vmem:[#allocation5 + $0x58] sm:$0xff]
    %v384 = vld [vmem:[#allocation5 + $0x60] sm:$0xff]
    %v385 = vld [vmem:[#allocation5 + $0x68] sm:$0xff]
    %v386 = vld [vmem:[#allocation5 + $0x70] sm:$0xff]
    %v387 = vld [vmem:[#allocation5 + $0x78] sm:$0xff]
    %v388 = vlaneseq
    %v389 = vshrl.u32 %v388, 7
    %v390 = vsub.s32 0, %v389
    %v391 = vrot.slane %v51, %v390
    %392 = vmatprep.subr.mxu0 0.0
    %393 = vmatpush1.msra.mxu0 %v372
    %394 = vmatprep.subr.mxu0 0.0
    %395 = vmatpush1.msra.mxu0 %v373
    %396 = vmatprep.subr.mxu0 0.0
    %397 = vmatpush1.msra.mxu0 %v374
    %398 = vmatprep.subr.mxu0 0.0
    %399 = vmatpush1.msra.mxu0 %v375
    %400 = vmatprep.subr.mxu0 0.0
    %401 = vmatpush1.msra.mxu0 %v376
    %402 = vmatprep.subr.mxu0 0.0
    %403 = vmatpush1.msra.mxu0 %v377
    %404 = vmatprep.subr.mxu0 0.0
    %405 = vmatpush1.msra.mxu0 %v378
    %406 = vmatprep.subr.mxu0 0.0
    %407 = vmatpush1.msra.mxu0 %v379
    %408 = vmatprep.subr.mxu0 0.0
    %409 = vmatpush1.msra.mxu0 %v380
    %410 = vmatprep.subr.mxu0 0.0
    %411 = vmatpush1.msra.mxu0 %v381
    %412 = vmatprep.subr.mxu0 0.0
    %413 = vmatpush1.msra.mxu0 %v382
    %414 = vmatprep.subr.mxu0 0.0
    %415 = vmatpush1.msra.mxu0 %v383
    %416 = vmatprep.subr.mxu0 0.0
    %417 = vmatpush1.msra.mxu0 %v384
    %418 = vmatprep.subr.mxu0 0.0
    %419 = vmatpush1.msra.mxu0 %v385
    %420 = vmatprep.subr.mxu0 0.0
    %421 = vmatpush1.msra.mxu0 %v386
    %422 = vmatprep.subr.mxu0 0.0
    %423 = vmatpush1.msra.mxu0 %v387
    %424 = vmatprep.subr.mxu0 0.0
    %425 = vmatpush1.msra.mxu0 0.0
    %426 = vmatprep.subr.mxu0 0.0
    %427 = vmatpush1.msra.mxu0 0.0
    %428 = vmatprep.subr.mxu0 0.0
    %429 = vmatpush1.msra.mxu0 0.0
    %430 = vmatprep.subr.mxu0 0.0
    %431 = vmatpush1.msra.mxu0 0.0
    %432 = vmatprep.subr.mxu0 0.0
    %433 = vmatpush1.msra.mxu0 0.0
    %434 = vmatprep.subr.mxu0 0.0
    %435 = vmatpush1.msra.mxu0 0.0
    %436 = vmatprep.subr.mxu0 0.0
    %437 = vmatpush1.msra.mxu0 0.0
    %438 = vmatprep.subr.mxu0 0.0
    %439 = vmatpush1.msra.mxu0 0.0
    %440 = vmatprep.subr.mxu0 0.0
    %441 = vmatpush1.msra.mxu0 0.0
    %442 = vmatprep.subr.mxu0 0.0
    %443 = vmatpush1.msra.mxu0 0.0
    %444 = vmatprep.subr.mxu0 0.0
    %445 = vmatpush1.msra.mxu0 0.0
    %446 = vmatprep.subr.mxu0 0.0
    %447 = vmatpush1.msra.mxu0 0.0
    %448 = vmatprep.subr.mxu0 0.0
    %449 = vmatpush1.msra.mxu0 0.0
    %450 = vmatprep.subr.mxu0 0.0
    %451 = vmatpush1.msra.mxu0 0.0
    %452 = vmatprep.subr.mxu0 0.0
    %453 = vmatpush1.msra.mxu0 0.0
    %454 = vmatprep.subr.mxu0 0.0
    %455 = vmatpush1.msra.mxu0 0.0
    %456 = vmatprep.mubr.f32.mxu0 0.0
    %457 = vmatmul.mubr.f32.gmra.mrb[0].mxu0 %v371
    %v458 = vpop.f32.mrb[0].mxu0
    %v459 = vadd.f32 %v391, %v458
    %v460 = vpop.f32.mrb[0].mxu0
    %461 = vdwg.mxu0
    %462 = vst [vmem:[#allocation7] sm:$0xff] %v459
    // Predicated region
    $region30: #{tpu_custom_call.1} parent=1 // pred_check
      _
    $region31: #{tpu_custom_call.1} parent=1 // pred_check_branch
      %464 = sbr.rel (0) target = $region33
    $region32: #{tpu_custom_call.1} parent=1 // pred_region
      %s466 = ssub.s32 128, 128
      %467 = vsyncadd [#allocation4], %s466
      %s469 = sshll.u32 [#allocation7], 4
      %s470 = int_to_ptr.vmem [resolvable:$true] %s469
      %472 = dma.vmem_to_hbm [thread:$0]  %s470, 128, %s5, [#allocation4]
    $region33: #{tpu_custom_call.1} parent=1 // pred_fallthru
      _
    // Predicated region
    $region34: #{tpu_custom_call.1} parent=1 // pred_check
      _
    $region35: #{tpu_custom_call.1} parent=1 // pred_check_branch
      %474 = sbr.rel (0) target = $region37
    $region36: #{tpu_custom_call.1} parent=1 // pred_region
      %475 = dma.done [#allocation4], 128
    $region37: #{tpu_custom_call.1} parent=1 // pred_fallthru
      _
    %476 = vsyncpa [#allocation3], 1
    %477 = vsyncpa [#allocation6], 1
    %478 = vsyncpa [#allocation4], 1

</llo_original>
